<compile_context>
chip_gen: v5e
topology: v5e:2x2
jax: 0.10.0
libtpu: 0.0.40
codegen_flags: <defaults>
</compile_context>

<pallas_src>
import functools

import jax
import jax.numpy as jnp
from jax import lax
from jax.experimental import pallas as pl
from jax.experimental.pallas import tpu as pltpu


def _fused_conv_kernel(w_ref, b_ref, xr_ref, xi_ref, o_ref, *,
                       KH, KW, Wp, Mflat, precision):
    """One grid step = one batch sample, dense (stride-1) merged-complex conv.

    w_ref : (2*Cout, 2*K)     merged complex weight, cols ordered (kh, kw, [re|im])
    b_ref : (2*Cout, 1)       merged bias (f32)
    xr_ref: (1, C, Hp*Wp)     real part of padded input, flattened spatial
    xi_ref: (1, C, Hp*Wp)     imag part of padded input, flattened spatial
    o_ref : (1, 2*Cout, Mflat) dense outputs over flattened spatial positions
    """
    # Stack real/imag on the channel (contraction) axis inside VMEM.
    x = jnp.concatenate([xr_ref[0], xi_ref[0]], axis=0)        # (2C, Hp*Wp)

    # In-kernel im2col: for output flat position m = oh*Wp + ow, the (kh, kw)
    # patch element lives at flat index m + kh*Wp + kw -> a contiguous lane
    # slice per (kh, kw).  Positions with ow >= OW wrap across padded rows and
    # produce junk that the wrapper discards.
    pieces = []
    for kh in range(KH):
        for kw in range(KW):
            a = kh * Wp + kw
            pieces.append(x[:, a:a + Mflat])                   # (2C, Mflat)
    p = jnp.concatenate(pieces, axis=0)                        # (2K, Mflat)

    # Single fused MXU dot (complex math folded into the merged weight),
    # f32 accumulation.
    acc = jnp.dot(w_ref[...], p, preferred_element_type=jnp.float32,
                  precision=precision)
    # NOTE: junk lanes get bias added too - harmless, they are sliced off in
    # the wrapper before anything consumes them.
    o_ref[0] = acc + b_ref[...]


def _vmem_limit_bytes(C, S, K2, C2, Mflat, in_bytes):
    """Explicit VMEM budget: double-buffered blocks + in-kernel temporaries."""
    db = 2  # double buffering by the BlockSpec pipeline
    est = db * (2 * C * S * in_bytes       # xr + xi input blocks
                + C2 * K2 * in_bytes       # merged weight block
                + C2 * 4                   # bias block
                + C2 * Mflat * 4)          # output block (f32)
    est += 2 * C * S * in_bytes            # in-kernel stacked input
    est += K2 * Mflat * in_bytes           # in-kernel patch tile
    est += 2 * C2 * Mflat * 4              # accumulator + store temp
    est = int(est * 1.5) + (1 << 20)
    try:
        phys = pltpu.get_tpu_info().vmem_capacity_bytes
    except Exception:
        phys = 64 << 20                    # conservative (v7x physical VMEM)
    cap = (phys * 3) // 4
    return int(min(max(est, 32 << 20), cap))


@functools.partial(jax.jit, static_argnames=("stride", "padding", "compute_dtype"))
def complex_conv2d(x, weight, bias, *, stride=1, padding=0,
                   compute_dtype=jnp.float32):
    """x: complex64 (or real) [N, Cin, H, W]; weight: complex64 [Cout, Cin, KH, KW];
    bias: complex64 [Cout]. Returns complex64 [N, Cout, OH, OW]."""
    x = x.astype(jnp.complex64)
    weight = weight.astype(jnp.complex64)
    bias = bias.astype(jnp.complex64)

    N, C, H, W = x.shape
    Cout, _, KH, KW = weight.shape
    Hp, Wp = H + 2 * padding, W + 2 * padding
    # Dense (stride-1) extents computed by the kernel; strided subsample after.
    OH1, OW1 = Hp - KH + 1, Wp - KW + 1
    OH = (H + 2 * padding - KH) // stride + 1
    OW = (W + 2 * padding - KW) // stride + 1
    K = C * KH * KW
    K2, C2 = 2 * K, 2 * Cout
    S = Hp * Wp
    Mflat = (OH1 - 1) * Wp + OW1           # flat spatial extent the kernel covers

    exact_f32 = jnp.dtype(compute_dtype) == jnp.dtype(jnp.float32)
    precision = lax.Precision.HIGHEST if exact_f32 else None

    # Cast to compute dtype BEFORE padding / reshaping (minimizes HBM traffic).
    pad_cfg = ((0, 0), (0, 0), (padding, padding), (padding, padding))
    xr = jnp.pad(jnp.real(x).astype(compute_dtype), pad_cfg).reshape(N, C, S)
    xi = jnp.pad(jnp.imag(x).astype(compute_dtype), pad_cfg).reshape(N, C, S)

    # Merged complex weight / bias (tiny; built in the wrapper).
    wr = jnp.real(weight).astype(jnp.float32)
    wi = jnp.imag(weight).astype(jnp.float32)
    wr_t = jnp.transpose(wr, (0, 2, 3, 1))                    # (Cout, KH, KW, C)
    wi_t = jnp.transpose(wi, (0, 2, 3, 1))
    top = jnp.concatenate([wr_t, -wi_t], axis=-1)             # real-out rows
    bot = jnp.concatenate([wi_t, wr_t], axis=-1)              # imag-out rows
    w_m = jnp.concatenate([top, bot], axis=0).reshape(C2, K2).astype(compute_dtype)
    b_m = jnp.concatenate([jnp.real(bias), jnp.imag(bias)]
                          ).astype(jnp.float32).reshape(C2, 1)

    in_bytes = jnp.dtype(compute_dtype).itemsize
    vmem_limit = _vmem_limit_bytes(C, S, K2, C2, Mflat, in_bytes)

    kernel = functools.partial(_fused_conv_kernel, KH=KH, KW=KW, Wp=Wp,
                               Mflat=Mflat, precision=precision)

    out_dense = pl.pallas_call(
        kernel,
        out_shape=jax.ShapeDtypeStruct((N, C2, Mflat), jnp.float32),
        grid_spec=pltpu.PrefetchScalarGridSpec(
            num_scalar_prefetch=0,
            grid=(N,),
            in_specs=[
                pl.BlockSpec((C2, K2), lambda n: (0, 0)),      # merged weight
                pl.BlockSpec((C2, 1), lambda n: (0, 0)),       # merged bias
                pl.BlockSpec((1, C, S), lambda n: (n, 0, 0)),  # padded real plane
                pl.BlockSpec((1, C, S), lambda n: (n, 0, 0)),  # padded imag plane
            ],
            out_specs=pl.BlockSpec((1, C2, Mflat), lambda n: (n, 0, 0)),
        ),
        compiler_params=pltpu.CompilerParams(
            dimension_semantics=("parallel",),
            vmem_limit_bytes=vmem_limit),
    )(w_m, b_m, xr, xi)

    # Output assembly (all small, ~(KH*KW)x less data than the old patch matrix):
    # tail-pad the flat axis to OH1*Wp, reshape, drop the wrapped junk columns.
    tail = OH1 * Wp - Mflat                                    # = KW - 1
    out = jnp.pad(out_dense, ((0, 0), (0, 0), (0, tail)))
    out = out.reshape(N, C2, OH1, Wp)[:, :, :, :OW1]
    if stride > 1:
        # TODO(synk): native strided path (strided lane slices in-kernel) to
        # avoid computing stride^2 extra dense outputs.
        out = out[:, :, ::stride, ::stride]
    out = out[:, :, :OH, :OW]
    return lax.complex(out[:, :Cout], out[:, Cout:])


def _reference_complex_conv2d(x, weight, bias, stride, padding):
    """Pure-JAX reference: 4 real convs via lax.conv_general_dilated."""
    x = x.astype(jnp.complex64)
    xr, xi = jnp.real(x), jnp.imag(x)
    wr, wi = jnp.real(weight), jnp.imag(weight)
    br, bi = jnp.real(bias), jnp.imag(bias)
    dn = lax.conv_dimension_numbers(xr.shape, wr.shape, ("NCHW", "OIHW", "NCHW"))
    conv = lambda a, b: lax.conv_general_dilated(
        a, b, (stride, stride), [(padding, padding), (padding, padding)],
        dimension_numbers=dn, precision=lax.Precision.HIGHEST)
    out_r = conv(xr, wr) - conv(xi, wi) + br.reshape(1, -1, 1, 1)
    out_i = conv(xr, wi) + conv(xi, wr) + bi.reshape(1, -1, 1, 1)
    return out_r + 1j * out_i


if __name__ == "__main__":
    # Module config: dim=4, dim_out=8, kernel_size=3, stride=1, padding=1
    N, Cin, Cout, H, W, KH, KW = 2, 4, 8, 16, 16, 3, 3
    stride, padding = 1, 1

    key = jax.random.PRNGKey(0)
    k_xr, k_xi, k_wr, k_wi, k_br, k_bi = jax.random.split(key, 6)

    # Deterministic synthetic params mirroring nn.Conv2d complex64 shapes.
    fan_in = Cin * KH * KW
    bound = 1.0 / jnp.sqrt(jnp.float32(fan_in))
    wr = jax.random.uniform(k_wr, (Cout, Cin, KH, KW), jnp.float32, -bound, bound)
    wi = jax.random.uniform(k_wi, (Cout, Cin, KH, KW), jnp.float32, -bound, bound)
    br = jax.random.uniform(k_br, (Cout,), jnp.float32, -bound, bound)
    bi = jax.random.uniform(k_bi, (Cout,), jnp.float32, -bound, bound)
    weight = (wr + 1j * wi).astype(jnp.complex64)
    bias = (br + 1j * bi).astype(jnp.complex64)

    xr = jax.random.normal(k_xr, (N, Cin, H, W), jnp.float32)
    xi = jax.random.normal(k_xi, (N, Cin, H, W), jnp.float32)
    x = (xr + 1j * xi).astype(jnp.complex64)

    ref = _reference_complex_conv2d(x, weight, bias, stride, padding)

    # Default path: f32 MXU math (parity with torch complex64 conv), tight tol.
    out = complex_conv2d(x, weight, bias, stride=stride, padding=padding)
    out = jax.block_until_ready(out)
    assert out.shape == (N, Cout, H, W) and out.dtype == jnp.complex64
    assert jnp.allclose(out, ref, atol=1e-4, rtol=1e-4)

    # Fast path: bf16 MXU inputs, f32 accumulation (looser tolerance).
    out_bf16 = complex_conv2d(x, weight, bias, stride=stride, padding=padding,
                              compute_dtype=jnp.bfloat16)
    out_bf16 = jax.block_until_ready(out_bf16)
    assert out_bf16.shape == (N, Cout, H, W)
    assert jnp.allclose(out_bf16, ref, atol=5e-2, rtol=5e-2)

    print("KERNEL_OK")
</pallas_src>

<mosaic_0001>
module attributes {stable_mosaic.version = 11 : i64} {
  func.func @_fused_conv_kernel(%arg0: i32, %arg1: memref<16x72xf32, #tpu.memory_space<vmem>>, %arg2: memref<16x1xf32, #tpu.memory_space<vmem>>, %arg3: memref<1x4x324xf32, #tpu.memory_space<vmem>>, %arg4: memref<1x4x324xf32, #tpu.memory_space<vmem>>, %arg5: memref<1x16x286xf32, #tpu.memory_space<vmem>>) attributes {dimension_semantics = [#tpu.dimension_semantics<parallel>], iteration_bounds = array<i64: 2>, scalar_prefetch = 0 : i64, scratch_operands = 0 : i64, tpu.core_type = #tpu.core_type<tc>, window_params = [{pipeline_mode = #tpu.pipeline_mode<synchronous>, transform_indices = @transform_0, window_bounds = array<i64: 16, 72>}, {pipeline_mode = #tpu.pipeline_mode<synchronous>, transform_indices = @transform_1, window_bounds = array<i64: 16, 1>}, {transform_indices = @transform_2, window_bounds = array<i64: 1, 4, 324>}, {transform_indices = @transform_3, window_bounds = array<i64: 1, 4, 324>}, {transform_indices = @transform_4, window_bounds = array<i64: 1, 16, 286>}]} {
    %c0 = arith.constant 0 : index
    %c0_0 = arith.constant 0 : index
    %c0_1 = arith.constant 0 : index
    %0 = vector.load %arg3[%c0, %c0_0, %c0_1] : memref<1x4x324xf32, #tpu.memory_space<vmem>>, vector<1x4x324xf32>
    %1 = vector.shape_cast %0 : vector<1x4x324xf32> to vector<4x324xf32>
    %c0_2 = arith.constant 0 : index
    %c0_3 = arith.constant 0 : index
    %c0_4 = arith.constant 0 : index
    %2 = vector.load %arg4[%c0_2, %c0_3, %c0_4] : memref<1x4x324xf32, #tpu.memory_space<vmem>>, vector<1x4x324xf32>
    %3 = vector.shape_cast %2 : vector<1x4x324xf32> to vector<4x324xf32>
    %4 = tpu.concatenate %1, %3 in 0 : vector<4x324xf32>, vector<4x324xf32> -> vector<8x324xf32>
    %5 = vector.extract_strided_slice %4 {offsets = [0, 0], sizes = [8, 286], strides = [1, 1]} : vector<8x324xf32> to vector<8x286xf32>
    %6 = vector.extract_strided_slice %4 {offsets = [0, 1], sizes = [8, 286], strides = [1, 1]} : vector<8x324xf32> to vector<8x286xf32>
    %7 = vector.extract_strided_slice %4 {offsets = [0, 2], sizes = [8, 286], strides = [1, 1]} : vector<8x324xf32> to vector<8x286xf32>
    %8 = vector.extract_strided_slice %4 {offsets = [0, 18], sizes = [8, 286], strides = [1, 1]} : vector<8x324xf32> to vector<8x286xf32>
    %9 = vector.extract_strided_slice %4 {offsets = [0, 19], sizes = [8, 286], strides = [1, 1]} : vector<8x324xf32> to vector<8x286xf32>
    %10 = vector.extract_strided_slice %4 {offsets = [0, 20], sizes = [8, 286], strides = [1, 1]} : vector<8x324xf32> to vector<8x286xf32>
    %11 = vector.extract_strided_slice %4 {offsets = [0, 36], sizes = [8, 286], strides = [1, 1]} : vector<8x324xf32> to vector<8x286xf32>
    %12 = vector.extract_strided_slice %4 {offsets = [0, 37], sizes = [8, 286], strides = [1, 1]} : vector<8x324xf32> to vector<8x286xf32>
    %13 = vector.extract_strided_slice %4 {offsets = [0, 38], sizes = [8, 286], strides = [1, 1]} : vector<8x324xf32> to vector<8x286xf32>
    %14 = tpu.concatenate %5, %6, %7, %8, %9, %10, %11, %12, %13 in 0 : vector<8x286xf32>, vector<8x286xf32>, vector<8x286xf32>, vector<8x286xf32>, vector<8x286xf32>, vector<8x286xf32>, vector<8x286xf32>, vector<8x286xf32>, vector<8x286xf32> -> vector<72x286xf32>
    %c0_5 = arith.constant 0 : index
    %c0_6 = arith.constant 0 : index
    %15 = vector.load %arg1[%c0_5, %c0_6] : memref<16x72xf32, #tpu.memory_space<vmem>>, vector<16x72xf32>
    %cst = arith.constant dense<0.000000e+00> : vector<16x286xf32>
    %16 = tpu.matmul %15, %14, %cst {dimension_numbers = #tpu.dot_dimension_numbers<[1], [0], [0], [1], [0, 0, 1, 1], [], []>, precision = #tpu.contract_precision<fp32>} : vector<16x72xf32>, vector<72x286xf32>, vector<16x286xf32> -> vector<16x286xf32>
    %c0_7 = arith.constant 0 : index
    %c0_8 = arith.constant 0 : index
    %17 = vector.load %arg2[%c0_7, %c0_8] : memref<16x1xf32, #tpu.memory_space<vmem>>, vector<16x1xf32>
    %18 = vector.broadcast %17 : vector<16x1xf32> to vector<16x286xf32>
    %19 = arith.addf %16, %18 : vector<16x286xf32>
    %c0_9 = arith.constant 0 : index
    %c0_10 = arith.constant 0 : index
    %c0_11 = arith.constant 0 : index
    %20 = vector.load %arg5[%c0_9, %c0_10, %c0_11] : memref<1x16x286xf32, #tpu.memory_space<vmem>>, vector<1x16x286xf32>
    %21 = vector.shape_cast %20 : vector<1x16x286xf32> to vector<16x286xf32>
    %22 = vector.shape_cast %19 : vector<16x286xf32> to vector<1x16x286xf32>
    tpu.vector_store %arg5[%c0_9, %c0_10, %c0_11], %22 {strides = array<i32>} : memref<1x16x286xf32, #tpu.memory_space<vmem>>, vector<1x16x286xf32>,
    return
  }
  func.func @transform_0(%arg0: i32) -> (i32, i32) {
    %c0_i32 = arith.constant 0 : i32
    %c0_i32_0 = arith.constant 0 : i32
    %c0_i32_1 = arith.constant 0 : i32
    return %c0_i32, %c0_i32_0 : i32, i32
  }
  func.func @transform_1(%arg0: i32) -> (i32, i32) {
    %c0_i32 = arith.constant 0 : i32
    %c0_i32_0 = arith.constant 0 : i32
    %c0_i32_1 = arith.constant 0 : i32
    return %c0_i32, %c0_i32_0 : i32, i32
  }
  func.func @transform_2(%arg0: i32) -> (i32, i32, i32) {
    %c0_i32 = arith.constant 0 : i32
    %c0_i32_0 = arith.constant 0 : i32
    %c0_i32_1 = arith.constant 0 : i32
    return %arg0, %c0_i32, %c0_i32_0 : i32, i32, i32
  }
  func.func @transform_3(%arg0: i32) -> (i32, i32, i32) {
    %c0_i32 = arith.constant 0 : i32
    %c0_i32_0 = arith.constant 0 : i32
    %c0_i32_1 = arith.constant 0 : i32
    return %arg0, %c0_i32, %c0_i32_0 : i32, i32, i32
  }
  func.func @transform_4(%arg0: i32) -> (i32, i32, i32) {
    %c0_i32 = arith.constant 0 : i32
    %c0_i32_0 = arith.constant 0 : i32
    %c0_i32_1 = arith.constant 0 : i32
    return %arg0, %c0_i32, %c0_i32_0 : i32, i32, i32
  }
}

</mosaic_0001>

<llo_original>
// kernel: custom-call.2
$region0: #{custom-call.2}
  %s0 = inlined_call_operand.hbm [shape: c64[8], index: 0, kind: input, shape index: {}]
  %s1 = inlined_call_operand.vmem [shape: f32[8], index: 1, kind: output, shape index: {}]
  $region1: #{custom-call.2} parent=0
    #allocation0 [shape = 's32[1]{0}', space=sflag, size = 0x4, scoped, tag = 'scoped memory for custom-call.2']
    %2 = vsyncpa [#allocation0], 0
    %s4 = sshll.u32 %s0, 4
    %s5 = int_to_ptr.hbm [resolvable:$true] %s4
    %s6 = sshll.u32 %s1, 4
    %s7 = int_to_ptr.vmem [resolvable:$true] %s6
    %9 = dma.hbm_to_vmem [thread:$0]  %s5, 16, %s7, [#allocation0]
    %11 = dma.done [#allocation0], 16
    %12 = vsyncpa [#allocation0], 1

// kernel: custom-call.3
$region0: #{custom-call.3}
  %s0 = inlined_call_operand.hbm [shape: c64[8], index: 0, kind: input, shape index: {}]
  %s1 = inlined_call_operand.vmem [shape: f32[8], index: 1, kind: output, shape index: {}]
  %s2 = scalar_lea.hbm %s0, 1
  $region1: #{custom-call.3} parent=0
    #allocation0 [shape = 's32[1]{0}', space=sflag, size = 0x4, scoped, tag = 'scoped memory for custom-call.3']
    %3 = vsyncpa [#allocation0], 0
    %s5 = sshll.u32 %s2, 4
    %s6 = int_to_ptr.hbm [resolvable:$true] %s5
    %s7 = sshll.u32 %s1, 4
    %s8 = int_to_ptr.vmem [resolvable:$true] %s7
    %10 = dma.hbm_to_vmem [thread:$0]  %s6, 16, %s8, [#allocation0]
    %12 = dma.done [#allocation0], 16
    %13 = vsyncpa [#allocation0], 1

// kernel: custom-call.1
$region0: #{custom-call.1}
  %s0 = inlined_call_operand.hbm [shape: c64[8,4,3,3], index: 0, kind: input, shape index: {}]
  %s1 = inlined_call_operand.vmem [shape: f32[8,4,3,3], index: 1, kind: output, shape index: {}]
  %s2 = scalar_lea.hbm %s0, 36
  $region1: #{custom-call.1} parent=0
    #allocation0 [shape = 's32[1]{0}', space=sflag, size = 0x4, scoped, tag = 'scoped memory for custom-call.1']
    %3 = vsyncpa [#allocation0], 0
    %s5 = sshll.u32 %s2, 4
    %s6 = int_to_ptr.hbm [resolvable:$true] %s5
    %s7 = sshll.u32 %s1, 4
    %s8 = int_to_ptr.vmem [resolvable:$true] %s7
    %10 = dma.hbm_to_vmem [thread:$0]  %s6, 576, %s8, [#allocation0]
    %12 = dma.done [#allocation0], 576
    %13 = vsyncpa [#allocation0], 1

// kernel: custom-call
$region0: #{custom-call}
  %s0 = inlined_call_operand.hbm [shape: c64[8,4,3,3], index: 0, kind: input, shape index: {}]
  %s1 = inlined_call_operand.vmem [shape: f32[8,4,3,3], index: 1, kind: output, shape index: {}]
  $region1: #{custom-call} parent=0
    #allocation0 [shape = 's32[1]{0}', space=sflag, size = 0x4, scoped, tag = 'scoped memory for custom-call']
    %2 = vsyncpa [#allocation0], 0
    %s4 = sshll.u32 %s0, 4
    %s5 = int_to_ptr.hbm [resolvable:$true] %s4
    %s6 = sshll.u32 %s1, 4
    %s7 = int_to_ptr.vmem [resolvable:$true] %s6
    %9 = dma.hbm_to_vmem [thread:$0]  %s5, 576, %s7, [#allocation0]
    %11 = dma.done [#allocation0], 576
    %12 = vsyncpa [#allocation0], 1

// kernel: custom-call.5
$region0: #{custom-call.5}
  %s0 = inlined_call_operand.hbm [shape: c64[2,4,16,16], index: 0, kind: input, shape index: {}]
  %s1 = inlined_call_operand.vmem [shape: f32[2,4,16,16], index: 1, kind: output, shape index: {}]
  %s2 = scalar_lea.hbm %s0, 128
  $region1: #{custom-call.5} parent=0
    #allocation0 [shape = 's32[1]{0}', space=sflag, size = 0x4, scoped, tag = 'scoped memory for custom-call.5']
    %3 = vsyncpa [#allocation0], 0
    %s5 = sshll.u32 %s2, 4
    %s6 = int_to_ptr.hbm [resolvable:$true] %s5
    %s7 = sshll.u32 %s1, 4
    %s8 = int_to_ptr.vmem [resolvable:$true] %s7
    %10 = dma.hbm_to_vmem [thread:$0]  %s6, 2048, %s8, [#allocation0]
    %12 = dma.done [#allocation0], 2048
    %13 = vsyncpa [#allocation0], 1

// kernel: custom-call.4
$region0: #{custom-call.4}
  %s0 = inlined_call_operand.hbm [shape: c64[2,4,16,16], index: 0, kind: input, shape index: {}]
  %s1 = inlined_call_operand.vmem [shape: f32[2,4,16,16], index: 1, kind: output, shape index: {}]
  $region1: #{custom-call.4} parent=0
    #allocation0 [shape = 's32[1]{0}', space=sflag, size = 0x4, scoped, tag = 'scoped memory for custom-call.4']
    %2 = vsyncpa [#allocation0], 0
    %s4 = sshll.u32 %s0, 4
    %s5 = int_to_ptr.hbm [resolvable:$true] %s4
    %s6 = sshll.u32 %s1, 4
    %s7 = int_to_ptr.vmem [resolvable:$true] %s6
    %9 = dma.hbm_to_vmem [thread:$0]  %s5, 2048, %s7, [#allocation0]
    %11 = dma.done [#allocation0], 2048
    %12 = vsyncpa [#allocation0], 1

// kernel: custom-call.6
$region0: #{custom-call.6}
  %s0 = inlined_call_operand.vmem [shape: f32[2,8,16,16], index: 0, kind: input, shape index: {}]
  %s1 = inlined_call_operand.vmem [shape: f32[2,8,16,16], index: 1, kind: input, shape index: {}]
  %s2 = inlined_call_operand.hbm [shape: c64[2,8,16,16], index: 2, kind: output, shape index: {}]
  %s3 = scalar_lea.hbm %s2, 256
  $region1: #{custom-call.6} parent=0
    #allocation0 [shape = 's32[1]{0}', space=sflag, size = 0x4, scoped, tag = 'scoped memory for custom-call.6']
    %4 = vsyncpa [#allocation0], 0
    %s6 = sshll.u32 %s0, 4
    %s7 = int_to_ptr.vmem [resolvable:$true] %s6
    %s8 = sshll.u32 %s2, 4
    %s9 = int_to_ptr.hbm [resolvable:$true] %s8
    %11 = dma.vmem_to_hbm [thread:$0]  %s7, 4096, %s9, [#allocation0]
    %13 = dma.done [#allocation0], 4096
    %14 = vsyncpa [#allocation0], 1
  $region2: #{custom-call.6} parent=0
    #allocation1 [shape = 's32[1]{0}', space=sflag, size = 0x4, scoped, tag = 'scoped memory for custom-call.6']
    %15 = vsyncpa [#allocation1], 0
    %s17 = sshll.u32 %s1, 4
    %s18 = int_to_ptr.vmem [resolvable:$true] %s17
    %s19 = sshll.u32 %s3, 4
    %s20 = int_to_ptr.hbm [resolvable:$true] %s19
    %22 = dma.vmem_to_hbm [thread:$0]  %s18, 4096, %s20, [#allocation1]
    %24 = dma.done [#allocation1], 4096
    %25 = vsyncpa [#allocation1], 1

// kernel: complex_conv2d.1
$region0: #{complex_conv2d.1}
  #allocation0 [shape = 'u32[]', space=smem, size = 0x4, offset = 0x4, fixed_abs, tag = 'smem constant byte address 0x4 - core index']
  #allocation1 [shape = 'u32[72,128]{1,0:T(1,128)}', space=vmem, size = 0x9000, scoped, tag = 'internal scratch']
  %s0 = inlined_call_operand.vmem [shape: f32[16,72], index: 0, kind: input, shape index: {}]
  %s1 = inlined_call_operand.vmem [shape: f32[16,1], index: 1, kind: input, shape index: {}]
  %s2 = inlined_call_operand.vmem [shape: f32[2,4,324], index: 2, kind: input, shape index: {}]
  %s3 = inlined_call_operand.vmem [shape: f32[2,4,324], index: 3, kind: input, shape index: {}]
  %s4 = inlined_call_operand.vmem [shape: f32[2,16,286], index: 4, kind: output, shape index: {}]
  %s5 = sld [smem:[#allocation0]]
  $region49: #{complex_conv2d.1} parent=0
    _
  %s7 = ssub.s32 1, %s5
  %s8 = scalar_select 0, %s7, %s5
  loop: start=0, step=1, limit=4
  $region2: #{complex_conv2d.1} parent=0 // loop_pre_header
    _
  $region3: #{complex_conv2d.1} parent=0 // loop_header
    %s10 = sphi 0, %s14
    %p11 = scmp.ge.s32.totalorder %s10, 4
    %s18 = sphi 0, %s18
    %s20 = sphi 0, %s18
    %s21 = sphi 0, %s20
    %s35 = sphi 0, %s21
    %s39 = sphi 0, %s39
    %s41 = sphi 0, %s39
    %s42 = sphi 0, %s41
    %s56 = sphi 0, %s42
    %s62 = sphi 0, %s64
    %s65 = sphi 0, %s62
    %s66 = sphi 0, %s65
    %s82 = sphi 0, %s66
    %s88 = sphi 0, %s90
    %s91 = sphi 0, %s88
    %s92 = sphi 0, %s91
    %s108 = sphi 0, %s92
    %s114 = sphi 0, %s116
    %s117 = sphi 0, %s114
    %s118 = sphi 0, %s117
    %s134 = sphi 0, %s118
  $region4: #{complex_conv2d.1} parent=0 // loop_header_branch
    %13 = sbr.rel (%p11) target = $region8
  $region5: #{complex_conv2d.1} parent=0 // loop_body
    %s15 = ssub.s32 %s10, 1
    %s16 = ssub.s32 %s10, 2
    %s17 = sadd.s32 %s10, 1
    %s19 = sadd.s32 %s18, 1
    %p22 = scmp.eq.s32.totalorder %s10, 1
    %p23 = scmp.ne.s32.totalorder %s18, %s20
    %p24 = scmp.eq.s32.totalorder %s10, 0
    %p25 = por %p23, %p24
    %p26 = scmp.ne.s32.totalorder %s18, %s20
    %p27 = scmp.eq.s32.totalorder %s15, 1
    %p28 = por %p26, %p27
    %p29 = scmp.ne.s32.totalorder %s20, %s21
    %p30 = scmp.eq.s32.totalorder %s15, 0
    %p31 = por %p29, %p30
    %p32 = scmp.ne.s32.totalorder %s20, %s21
    %p33 = scmp.eq.s32.totalorder %s16, 1
    %p34 = por %p32, %p33
    %p36 = scmp.ne.s32.totalorder %s21, %s35
    %p37 = scmp.eq.s32.totalorder %s16, 0
    %p38 = por %p36, %p37
    %s40 = sadd.s32 %s39, 1
    %p43 = scmp.eq.s32.totalorder %s10, 1
    %p44 = scmp.ne.s32.totalorder %s39, %s41
    %p45 = scmp.eq.s32.totalorder %s10, 0
    %p46 = por %p44, %p45
    %p47 = scmp.ne.s32.totalorder %s39, %s41
    %p48 = scmp.eq.s32.totalorder %s15, 1
    %p49 = por %p47, %p48
    %p50 = scmp.ne.s32.totalorder %s41, %s42
    %p51 = scmp.eq.s32.totalorder %s15, 0
    %p52 = por %p50, %p51
    %p53 = scmp.ne.s32.totalorder %s41, %s42
    %p54 = scmp.eq.s32.totalorder %s16, 1
    %p55 = por %p53, %p54
    %p57 = scmp.ne.s32.totalorder %s42, %s56
    %p58 = scmp.eq.s32.totalorder %s16, 0
    %p59 = por %p57, %p58
    %s60 = ssub.s32 %s10, %s17
    %p61 = scmp.eq.s32.totalorder %s60, 0
    %s63 = sadd.s32 %s62, 1
    %s64 = scalar_select %p61, %s62, %s63
    %p67 = pneg %p61
    %p68 = scmp.eq.s32.totalorder %s10, 1
    %p69 = por %p67, %p68
    %p70 = scmp.ne.s32.totalorder %s62, %s65
    %p71 = scmp.eq.s32.totalorder %s10, 0
    %p72 = por %p70, %p71
    %p73 = scmp.ne.s32.totalorder %s62, %s65
    %p74 = scmp.eq.s32.totalorder %s15, 1
    %p75 = por %p73, %p74
    %p76 = scmp.ne.s32.totalorder %s65, %s66
    %p77 = scmp.eq.s32.totalorder %s15, 0
    %p78 = por %p76, %p77
    %p79 = scmp.ne.s32.totalorder %s65, %s66
    %p80 = scmp.eq.s32.totalorder %s16, 1
    %p81 = por %p79, %p80
    %p83 = scmp.ne.s32.totalorder %s66, %s82
    %p84 = scmp.eq.s32.totalorder %s16, 0
    %p85 = por %p83, %p84
    %s86 = ssub.s32 %s10, %s17
    %p87 = scmp.eq.s32.totalorder %s86, 0
    %s89 = sadd.s32 %s88, 1
    %s90 = scalar_select %p87, %s88, %s89
    %p93 = pneg %p87
    %p94 = scmp.eq.s32.totalorder %s10, 1
    %p95 = por %p93, %p94
    %p96 = scmp.ne.s32.totalorder %s88, %s91
    %p97 = scmp.eq.s32.totalorder %s10, 0
    %p98 = por %p96, %p97
    %p99 = scmp.ne.s32.totalorder %s88, %s91
    %p100 = scmp.eq.s32.totalorder %s15, 1
    %p101 = por %p99, %p100
    %p102 = scmp.ne.s32.totalorder %s91, %s92
    %p103 = scmp.eq.s32.totalorder %s15, 0
    %p104 = por %p102, %p103
    %p105 = scmp.ne.s32.totalorder %s91, %s92
    %p106 = scmp.eq.s32.totalorder %s16, 1
    %p107 = por %p105, %p106
    %p109 = scmp.ne.s32.totalorder %s92, %s108
    %p110 = scmp.eq.s32.totalorder %s16, 0
    %p111 = por %p109, %p110
    %s112 = ssub.s32 %s10, %s17
    %p113 = scmp.eq.s32.totalorder %s112, 0
    %s115 = sadd.s32 %s114, 1
    %s116 = scalar_select %p113, %s114, %s115
    %p119 = pneg %p113
    %p120 = scmp.eq.s32.totalorder %s10, 1
    %p121 = por %p119, %p120
    %p122 = scmp.ne.s32.totalorder %s114, %s117
    %p123 = scmp.eq.s32.totalorder %s10, 0
    %p124 = por %p122, %p123
    %p125 = scmp.ne.s32.totalorder %s114, %s117
    %p126 = scmp.eq.s32.totalorder %s15, 1
    %p127 = por %p125, %p126
    %p128 = scmp.ne.s32.totalorder %s117, %s118
    %p129 = scmp.eq.s32.totalorder %s15, 0
    %p130 = por %p128, %p129
    %p131 = scmp.ne.s32.totalorder %s117, %s118
    %p132 = scmp.eq.s32.totalorder %s16, 1
    %p133 = por %p131, %p132
    %p135 = scmp.ne.s32.totalorder %s118, %s134
    %p136 = scmp.eq.s32.totalorder %s16, 0
    %p137 = por %p135, %p136
    %p138 = scmp.le.s32.totalorder 1, %s10
    %p139 = scmp.lt.s32.totalorder %s10, 3
    %p140 = pnand %p138, %p139
    %p141 = pneg %p140
    // Predicated region
    $region9: #{complex_conv2d.1} parent=5 // pred_check
      _
    $region10: #{complex_conv2d.1} parent=5 // pred_check_branch
      %143 = sbr.rel (%p140) target = $region12
    $region11: #{complex_conv2d.1} parent=5 // pred_region
      %s144 = ssub.s32 %s10, 1
      // Predicated region
      $region13: #{complex_conv2d.1} parent=11 // pred_check
        %p145 = pneg %p31
      $region14: #{complex_conv2d.1} parent=11 // pred_check_branch
        %147 = sbr.rel (%p145) target = $region16
      $region15: #{complex_conv2d.1} parent=11 // pred_region
        _
      $region16: #{complex_conv2d.1} parent=11 // pred_fallthru
        _
      // Predicated region
      $region17: #{complex_conv2d.1} parent=11 // pred_check
        %p148 = pneg %p52
      $region18: #{complex_conv2d.1} parent=11 // pred_check_branch
        %150 = sbr.rel (%p148) target = $region20
      $region19: #{complex_conv2d.1} parent=11 // pred_region
        _
      $region20: #{complex_conv2d.1} parent=11 // pred_fallthru
        _
    $region12: #{complex_conv2d.1} parent=5 // pred_fallthru
      _
    %p151 = scmp.lt.s32.totalorder %s10, 2
    // Predicated region
    $region21: #{complex_conv2d.1} parent=5 // pred_check
      %p152 = pneg %p151
    $region22: #{complex_conv2d.1} parent=5 // pred_check_branch
      %154 = sbr.rel (%p152) target = $region24
    $region23: #{complex_conv2d.1} parent=5 // pred_region
      // Predicated region
      $region25: #{complex_conv2d.1} parent=23 // pred_check
        %p155 = pneg %p72
      $region26: #{complex_conv2d.1} parent=23 // pred_check_branch
        %157 = sbr.rel (%p155) target = $region28
      $region27: #{complex_conv2d.1} parent=23 // pred_region
        %p158 = scmp.lt.s32.totalorder %s10, 1
        %s159 = scalar_select %p158, %s10, 1
        %s160 = smul.addr %s159, 3
        %s161 = smul.addr %s160, 4
        %s162 = scalar_lea.vmem %s2, %s161
      $region28: #{complex_conv2d.1} parent=23 // pred_fallthru
        _
      // Predicated region
      $region29: #{complex_conv2d.1} parent=23 // pred_check
        %p163 = pneg %p98
      $region30: #{complex_conv2d.1} parent=23 // pred_check_branch
        %165 = sbr.rel (%p163) target = $region32
      $region31: #{complex_conv2d.1} parent=23 // pred_region
        %p166 = scmp.lt.s32.totalorder %s10, 1
        %s167 = scalar_select %p166, %s10, 1
        %s168 = smul.addr %s167, 3
        %s169 = smul.addr %s168, 4
        %s170 = scalar_lea.vmem %s3, %s169
      $region32: #{complex_conv2d.1} parent=23 // pred_fallthru
        _
    $region24: #{complex_conv2d.1} parent=5 // pred_fallthru
      _
    %p171 = scmp.le.s32.totalorder 1, %s10
    %p172 = scmp.lt.s32.totalorder %s10, 3
    %p173 = pnand %p171, %p172
    %p174 = pneg %p173
    // Predicated region
    $region33: #{complex_conv2d.1} parent=5 // pred_check
      _
    $region34: #{complex_conv2d.1} parent=5 // pred_check_branch
      %176 = sbr.rel (%p173) target = $region36
    $region35: #{complex_conv2d.1} parent=5 // pred_region
      %s177 = ssub.s32 %s10, 1
      %p178 = pneg %p31
      %p179 = pneg %p28
      %p180 = pneg %p52
      %p181 = pneg %p49
      %p182 = scmp.lt.s32.totalorder %s15, 1
      %s183 = scalar_select %p182, %s15, 1
      %s184 = smul.addr %s183, 3
      %s185 = smul.addr %s184, 4
      %s186 = scalar_lea.vmem %s2, %s185
      %p187 = pneg %p78
      %p188 = pneg %p75
      %p189 = scmp.lt.s32.totalorder %s15, 1
      %s190 = scalar_select %p189, %s15, 1
      %s191 = smul.addr %s190, 3
      %s192 = smul.addr %s191, 4
      %s193 = scalar_lea.vmem %s3, %s192
      %p194 = pneg %p104
      %p195 = pneg %p101
      %p196 = pneg %p130
      %p197 = pneg %p127
      %p198 = scmp.lt.s32.totalorder %s15, 1
      %s199 = scalar_select %p198, %s15, 1
      %s200 = smul.addr %s199, 6
      %s201 = smul.addr %s200, 8
      %s202 = scalar_lea.vmem %s4, %s201
      %p203 = scmp.lt.s32.totalorder %s15, 1
      %s204 = scalar_select %p203, %s15, 1
      %s205 = smul.addr %s204, 3
      %s206 = smul.addr %s205, 4
      %s207 = scalar_lea.vmem %s2, %s206
      %p208 = scmp.lt.s32.totalorder %s15, 1
      %s209 = scalar_select %p208, %s15, 1
      %s210 = smul.addr %s209, 3
      %s211 = smul.addr %s210, 4
      %s212 = scalar_lea.vmem %s3, %s211
      %p213 = scmp.lt.s32.totalorder %s15, 1
      %s214 = scalar_select %p213, %s15, 1
      %s215 = smul.addr %s214, 6
      %s216 = smul.addr %s215, 8
      %s217 = scalar_lea.vmem %s4, %s216
      %v218 = vld [vmem:[%s207] sm:$0xff]
      %v219 = vld [vmem:[%s207 + $0x8] sm:$0xf]
      %v220 = vld [vmem:[%s212] sm:$0xff]
      %v221 = vld [vmem:[%s212 + $0x8] sm:$0xf]
      %224 = vst [vmem:[#allocation1] ss:$2 sm:$0xff] %v218
      %s225 = scalar_lea.vmem [#allocation1], 16
      %226 = vst [vmem:[%s225] ss:$2 sm:$0xff] %v219
      %v227 = vld.sshfl [vmem:[#allocation1] sm:$0xff pattern:$0x75316420]
      %v228 = vld.sshfl [vmem:[#allocation1 + $0x8] sm:$0xff pattern:$0x75316420]
      %v229 = vld.sshfl [vmem:[#allocation1 + $0x10] sm:$0xff pattern:$0x75316420]
      %s235 = scalar_lea.vmem [#allocation1], 1
      %236 = vst [vmem:[%s235] ss:$2 sm:$0xff] %v220
      %s237 = scalar_lea.vmem [#allocation1], 17
      %238 = vst [vmem:[%s237] ss:$2 sm:$0xff] %v221
      %v239 = vld.sshfl [vmem:[#allocation1] sm:$0xff pattern:$0x75316420]
      %v240 = vld.sshfl [vmem:[#allocation1 + $0x8] sm:$0xff pattern:$0x75316420]
      %v241 = vld.sshfl [vmem:[#allocation1 + $0x10] sm:$0xff pattern:$0x75316420]
      %vm245 = vcmask 1043456
      %v246 = vsel %vm245, %v227, %v239
      %v247 = vsel %vm245, %v228, %v240
      %v248 = vsel %vm245, %v229, %v241
      %252 = vrot.lane.b32.xlu0 %v246, 127
      %v253 = vpop.permute.xlu0 %252
      %254 = vrot.lane.b32.xlu0 %v247, 127
      %v255 = vpop.permute.xlu0 %254
      %256 = vrot.lane.b32.xlu0 %v248, 127
      %v257 = vpop.permute.xlu0 %256
      %vm258 = vcmask 1039360
      %v259 = vsel %vm258, %v253, %v255
      %v260 = vsel %vm258, %v255, %v257
      %264 = vrot.lane.b32.xlu0 %v246, 126
      %v265 = vpop.permute.xlu0 %264
      %266 = vrot.lane.b32.xlu0 %v247, 126
      %v267 = vpop.permute.xlu0 %266
      %268 = vrot.lane.b32.xlu0 %v248, 126
      %v269 = vpop.permute.xlu0 %268
      %vm270 = vcmask 1031168
      %v271 = vsel %vm270, %v265, %v267
      %v272 = vsel %vm270, %v267, %v269
      %276 = vrot.lane.b32.xlu0 %v246, 110
      %v277 = vpop.permute.xlu0 %276
      %278 = vrot.lane.b32.xlu0 %v247, 110
      %v279 = vpop.permute.xlu0 %278
      %280 = vrot.lane.b32.xlu0 %v248, 110
      %v281 = vpop.permute.xlu0 %280
      %vm282 = vcmask 900096
      %v283 = vsel %vm282, %v277, %v279
      %v284 = vsel %vm282, %v279, %v281
      %288 = vrot.lane.b32.xlu0 %v246, 109
      %v289 = vpop.permute.xlu0 %288
      %290 = vrot.lane.b32.xlu0 %v247, 109
      %v291 = vpop.permute.xlu0 %290
      %292 = vrot.lane.b32.xlu0 %v248, 109
      %v293 = vpop.permute.xlu0 %292
      %vm294 = vcmask 891904
      %v295 = vsel %vm294, %v289, %v291
      %v296 = vsel %vm294, %v291, %v293
      %300 = vrot.lane.b32.xlu0 %v246, 108
      %v301 = vpop.permute.xlu0 %300
      %302 = vrot.lane.b32.xlu0 %v247, 108
      %v303 = vpop.permute.xlu0 %302
      %304 = vrot.lane.b32.xlu0 %v248, 108
      %v305 = vpop.permute.xlu0 %304
      %vm306 = vcmask 883712
      %v307 = vsel %vm306, %v301, %v303
      %v308 = vsel %vm306, %v303, %v305
      %312 = vrot.lane.b32.xlu0 %v246, 92
      %v313 = vpop.permute.xlu0 %312
      %314 = vrot.lane.b32.xlu0 %v247, 92
      %v315 = vpop.permute.xlu0 %314
      %316 = vrot.lane.b32.xlu0 %v248, 92
      %v317 = vpop.permute.xlu0 %316
      %vm318 = vcmask 752640
      %v319 = vsel %vm318, %v313, %v315
      %v320 = vsel %vm318, %v315, %v317
      %324 = vrot.lane.b32.xlu0 %v246, 91
      %v325 = vpop.permute.xlu0 %324
      %326 = vrot.lane.b32.xlu0 %v247, 91
      %v327 = vpop.permute.xlu0 %326
      %328 = vrot.lane.b32.xlu0 %v248, 91
      %v329 = vpop.permute.xlu0 %328
      %vm330 = vcmask 744448
      %v331 = vsel %vm330, %v325, %v327
      %v332 = vsel %vm330, %v327, %v329
      %336 = vrot.lane.b32.xlu0 %v246, 90
      %v337 = vpop.permute.xlu0 %336
      %338 = vrot.lane.b32.xlu0 %v247, 90
      %v339 = vpop.permute.xlu0 %338
      %340 = vrot.lane.b32.xlu0 %v248, 90
      %v341 = vpop.permute.xlu0 %340
      %vm342 = vcmask 736256
      %v343 = vsel %vm342, %v337, %v339
      %v344 = vsel %vm342, %v339, %v341
      %v348 = vld [vmem:[%s0] sm:$0xff]
      %v349 = vld [vmem:[%s0 + $0x8] sm:$0xff]
      %v350 = vld [vmem:[%s1] sm:$0xff]
      %v351 = vld [vmem:[%s1 + $0x8] sm:$0xff]
      %353 = vset.pattern.permute.xlu0 0
      %354 = vperm.xlu0 %353, %v350
      %v355 = vpop.permute.xlu0 %354
      %358 = vset.pattern.permute.xlu0 0
      %359 = vperm.xlu0 %358, %v351
      %v360 = vpop.permute.xlu0 %359
      %vm362 = vcmask 588800
      %v364 = vsel %vm362, %v348, 0
      %v367 = vsel %vm362, %v349, 0
      %369 = vmatpush.msra.mxu0 0.0
      %370 = vmatpush.msra.mxu0 0.0
      %371 = vmatpush.msra.mxu0 0.0
      %372 = vmatpush.msra.mxu0 0.0
      %373 = vmatpush.msra.mxu0 0.0
      %374 = vmatpush.msra.mxu0 0.0
      %375 = vmatpush.msra.mxu0 0.0
      %v376 = vand.u32 %v343, 4294901760
      %377 = vmatpush.msra.mxu0 %v376
      %v378 = vand.u32 %v331, 4294901760
      %379 = vmatpush.msra.mxu0 %v378
      %v380 = vand.u32 %v319, 4294901760
      %381 = vmatpush.msra.mxu0 %v380
      %v382 = vand.u32 %v307, 4294901760
      %383 = vmatpush.msra.mxu0 %v382
      %v384 = vand.u32 %v295, 4294901760
      %385 = vmatpush.msra.mxu0 %v384
      %v386 = vand.u32 %v283, 4294901760
      %387 = vmatpush.msra.mxu0 %v386
      %v388 = vand.u32 %v271, 4294901760
      %389 = vmatpush.msra.mxu0 %v388
      %v390 = vand.u32 %v259, 4294901760
      %391 = vmatpush.msra.mxu0 %v390
      %v392 = vand.u32 %v246, 4294901760
      %393 = vmatpush.msra.mxu0 %v392
      %v394 = vand.u32 %v364, 4294901760
      %v395 = vsub.f32 %v364, %v394
      %v396 = vand.u32 %v395, 4294901760
      %v397 = vsub.f32 %v395, %v396
      %v398 = vand.u32 %v397, 4294901760
      %399 = vmatmul.f32.gmra.mxu0 %v398
      %v400 = vpop.f32.mrf.mxu0
      %v401 = vadd.f32 %v355, %v400
      %v402 = vand.u32 %v367, 4294901760
      %v403 = vsub.f32 %v367, %v402
      %v404 = vand.u32 %v403, 4294901760
      %v405 = vsub.f32 %v403, %v404
      %v406 = vand.u32 %v405, 4294901760
      %407 = vmatmul.f32.gmra.mxu0 %v406
      %v408 = vpop.f32.mrf.mxu0
      %v409 = vadd.f32 %v360, %v408
      %410 = vdwg.mxu0
      %411 = vmatpush.msra.mxu0 0.0
      %412 = vmatpush.msra.mxu0 0.0
      %413 = vmatpush.msra.mxu0 0.0
      %414 = vmatpush.msra.mxu0 0.0
      %415 = vmatpush.msra.mxu0 0.0
      %416 = vmatpush.msra.mxu0 0.0
      %417 = vmatpush.msra.mxu0 0.0
      %v418 = vand.u32 %v343, 4294901760
      %v419 = vsub.f32 %v343, %v418
      %v420 = vand.u32 %v419, 4294901760
      %v421 = vsub.f32 %v419, %v420
      %v422 = vand.u32 %v421, 4294901760
      %423 = vmatpush.msra.mxu0 %v422
      %v424 = vand.u32 %v331, 4294901760
      %v425 = vsub.f32 %v331, %v424
      %v426 = vand.u32 %v425, 4294901760
      %v427 = vsub.f32 %v425, %v426
      %v428 = vand.u32 %v427, 4294901760
      %429 = vmatpush.msra.mxu0 %v428
      %v430 = vand.u32 %v319, 4294901760
      %v431 = vsub.f32 %v319, %v430
      %v432 = vand.u32 %v431, 4294901760
      %v433 = vsub.f32 %v431, %v432
      %v434 = vand.u32 %v433, 4294901760
      %435 = vmatpush.msra.mxu0 %v434
      %v436 = vand.u32 %v307, 4294901760
      %v437 = vsub.f32 %v307, %v436
      %v438 = vand.u32 %v437, 4294901760
      %v439 = vsub.f32 %v437, %v438
      %v440 = vand.u32 %v439, 4294901760
      %441 = vmatpush.msra.mxu0 %v440
      %v442 = vand.u32 %v295, 4294901760
      %v443 = vsub.f32 %v295, %v442
      %v444 = vand.u32 %v443, 4294901760
      %v445 = vsub.f32 %v443, %v444
      %v446 = vand.u32 %v445, 4294901760
      %447 = vmatpush.msra.mxu0 %v446
      %v448 = vand.u32 %v283, 4294901760
      %v449 = vsub.f32 %v283, %v448
      %v450 = vand.u32 %v449, 4294901760
      %v451 = vsub.f32 %v449, %v450
      %v452 = vand.u32 %v451, 4294901760
      %453 = vmatpush.msra.mxu0 %v452
      %v454 = vand.u32 %v271, 4294901760
      %v455 = vsub.f32 %v271, %v454
      %v456 = vand.u32 %v455, 4294901760
      %v457 = vsub.f32 %v455, %v456
      %v458 = vand.u32 %v457, 4294901760
      %459 = vmatpush.msra.mxu0 %v458
      %v460 = vand.u32 %v259, 4294901760
      %v461 = vsub.f32 %v259, %v460
      %v462 = vand.u32 %v461, 4294901760
      %v463 = vsub.f32 %v461, %v462
      %v464 = vand.u32 %v463, 4294901760
      %465 = vmatpush.msra.mxu0 %v464
      %v466 = vand.u32 %v246, 4294901760
      %v467 = vsub.f32 %v246, %v466
      %v468 = vand.u32 %v467, 4294901760
      %v469 = vsub.f32 %v467, %v468
      %v470 = vand.u32 %v469, 4294901760
      %471 = vmatpush.msra.mxu0 %v470
      %v472 = vand.u32 %v364, 4294901760
      %473 = vmatmul.f32.gmra.mxu0 %v472
      %v474 = vpop.f32.mrf.mxu0
      %v475 = vadd.f32 %v401, %v474
      %v476 = vand.u32 %v367, 4294901760
      %477 = vmatmul.f32.gmra.mxu0 %v476
      %v478 = vpop.f32.mrf.mxu0
      %v479 = vadd.f32 %v409, %v478
      %480 = vdwg.mxu0
      %481 = vmatpush.msra.mxu0 0.0
      %482 = vmatpush.msra.mxu0 0.0
      %483 = vmatpush.msra.mxu0 0.0
      %484 = vmatpush.msra.mxu0 0.0
      %485 = vmatpush.msra.mxu0 0.0
      %486 = vmatpush.msra.mxu0 0.0
      %487 = vmatpush.msra.mxu0 0.0
      %v488 = vand.u32 %v343, 4294901760
      %v489 = vsub.f32 %v343, %v488
      %490 = vmatpush.msra.mxu0 %v489
      %v491 = vand.u32 %v331, 4294901760
      %v492 = vsub.f32 %v331, %v491
      %493 = vmatpush.msra.mxu0 %v492
      %v494 = vand.u32 %v319, 4294901760
      %v495 = vsub.f32 %v319, %v494
      %496 = vmatpush.msra.mxu0 %v495
      %v497 = vand.u32 %v307, 4294901760
      %v498 = vsub.f32 %v307, %v497
      %499 = vmatpush.msra.mxu0 %v498
      %v500 = vand.u32 %v295, 4294901760
      %v501 = vsub.f32 %v295, %v500
      %502 = vmatpush.msra.mxu0 %v501
      %v503 = vand.u32 %v283, 4294901760
      %v504 = vsub.f32 %v283, %v503
      %505 = vmatpush.msra.mxu0 %v504
      %v506 = vand.u32 %v271, 4294901760
      %v507 = vsub.f32 %v271, %v506
      %508 = vmatpush.msra.mxu0 %v507
      %v509 = vand.u32 %v259, 4294901760
      %v510 = vsub.f32 %v259, %v509
      %511 = vmatpush.msra.mxu0 %v510
      %v512 = vand.u32 %v246, 4294901760
      %v513 = vsub.f32 %v246, %v512
      %514 = vmatpush.msra.mxu0 %v513
      %v515 = vand.u32 %v364, 4294901760
      %v516 = vsub.f32 %v364, %v515
      %517 = vmatmul.f32.gmra.mxu0 %v516
      %v518 = vpop.f32.mrf.mxu0
      %v519 = vadd.f32 %v475, %v518
      %v520 = vand.u32 %v367, 4294901760
      %v521 = vsub.f32 %v367, %v520
      %522 = vmatmul.f32.gmra.mxu0 %v521
      %v523 = vpop.f32.mrf.mxu0
      %v524 = vadd.f32 %v479, %v523
      %525 = vdwg.mxu0
      %526 = vmatpush.msra.mxu0 0.0
      %527 = vmatpush.msra.mxu0 0.0
      %528 = vmatpush.msra.mxu0 0.0
      %529 = vmatpush.msra.mxu0 0.0
      %530 = vmatpush.msra.mxu0 0.0
      %531 = vmatpush.msra.mxu0 0.0
      %532 = vmatpush.msra.mxu0 0.0
      %v533 = vand.u32 %v343, 4294901760
      %534 = vmatpush.msra.mxu0 %v533
      %v535 = vand.u32 %v331, 4294901760
      %536 = vmatpush.msra.mxu0 %v535
      %v537 = vand.u32 %v319, 4294901760
      %538 = vmatpush.msra.mxu0 %v537
      %v539 = vand.u32 %v307, 4294901760
      %540 = vmatpush.msra.mxu0 %v539
      %v541 = vand.u32 %v295, 4294901760
      %542 = vmatpush.msra.mxu0 %v541
      %v543 = vand.u32 %v283, 4294901760
      %544 = vmatpush.msra.mxu0 %v543
      %v545 = vand.u32 %v271, 4294901760
      %546 = vmatpush.msra.mxu0 %v545
      %v547 = vand.u32 %v259, 4294901760
      %548 = vmatpush.msra.mxu0 %v547
      %v549 = vand.u32 %v246, 4294901760
      %550 = vmatpush.msra.mxu0 %v549
      %v551 = vand.u32 %v364, 4294901760
      %v552 = vsub.f32 %v364, %v551
      %v553 = vand.u32 %v552, 4294901760
      %554 = vmatmul.f32.gmra.mxu0 %v553
      %v555 = vpop.f32.mrf.mxu0
      %v556 = vadd.f32 %v519, %v555
      %v557 = vand.u32 %v367, 4294901760
      %v558 = vsub.f32 %v367, %v557
      %v559 = vand.u32 %v558, 4294901760
      %560 = vmatmul.f32.gmra.mxu0 %v559
      %v561 = vpop.f32.mrf.mxu0
      %v562 = vadd.f32 %v524, %v561
      %563 = vdwg.mxu0
      %564 = vmatpush.msra.mxu0 0.0
      %565 = vmatpush.msra.mxu0 0.0
      %566 = vmatpush.msra.mxu0 0.0
      %567 = vmatpush.msra.mxu0 0.0
      %568 = vmatpush.msra.mxu0 0.0
      %569 = vmatpush.msra.mxu0 0.0
      %570 = vmatpush.msra.mxu0 0.0
      %v571 = vand.u32 %v343, 4294901760
      %v572 = vsub.f32 %v343, %v571
      %v573 = vand.u32 %v572, 4294901760
      %574 = vmatpush.msra.mxu0 %v573
      %v575 = vand.u32 %v331, 4294901760
      %v576 = vsub.f32 %v331, %v575
      %v577 = vand.u32 %v576, 4294901760
      %578 = vmatpush.msra.mxu0 %v577
      %v579 = vand.u32 %v319, 4294901760
      %v580 = vsub.f32 %v319, %v579
      %v581 = vand.u32 %v580, 4294901760
      %582 = vmatpush.msra.mxu0 %v581
      %v583 = vand.u32 %v307, 4294901760
      %v584 = vsub.f32 %v307, %v583
      %v585 = vand.u32 %v584, 4294901760
      %586 = vmatpush.msra.mxu0 %v585
      %v587 = vand.u32 %v295, 4294901760
      %v588 = vsub.f32 %v295, %v587
      %v589 = vand.u32 %v588, 4294901760
      %590 = vmatpush.msra.mxu0 %v589
      %v591 = vand.u32 %v283, 4294901760
      %v592 = vsub.f32 %v283, %v591
      %v593 = vand.u32 %v592, 4294901760
      %594 = vmatpush.msra.mxu0 %v593
      %v595 = vand.u32 %v271, 4294901760
      %v596 = vsub.f32 %v271, %v595
      %v597 = vand.u32 %v596, 4294901760
      %598 = vmatpush.msra.mxu0 %v597
      %v599 = vand.u32 %v259, 4294901760
      %v600 = vsub.f32 %v259, %v599
      %v601 = vand.u32 %v600, 4294901760
      %602 = vmatpush.msra.mxu0 %v601
      %v603 = vand.u32 %v246, 4294901760
      %v604 = vsub.f32 %v246, %v603
      %v605 = vand.u32 %v604, 4294901760
      %606 = vmatpush.msra.mxu0 %v605
      %v607 = vand.u32 %v364, 4294901760
      %608 = vmatmul.f32.gmra.mxu0 %v607
      %v609 = vpop.f32.mrf.mxu0
      %v610 = vadd.f32 %v556, %v609
      %v611 = vand.u32 %v367, 4294901760
      %612 = vmatmul.f32.gmra.mxu0 %v611
      %v613 = vpop.f32.mrf.mxu0
      %v614 = vadd.f32 %v562, %v613
      %615 = vdwg.mxu0
      %616 = vmatpush.msra.mxu0 0.0
      %617 = vmatpush.msra.mxu0 0.0
      %618 = vmatpush.msra.mxu0 0.0
      %619 = vmatpush.msra.mxu0 0.0
      %620 = vmatpush.msra.mxu0 0.0
      %621 = vmatpush.msra.mxu0 0.0
      %622 = vmatpush.msra.mxu0 0.0
      %v623 = vand.u32 %v343, 4294901760
      %624 = vmatpush.msra.mxu0 %v623
      %v625 = vand.u32 %v331, 4294901760
      %626 = vmatpush.msra.mxu0 %v625
      %v627 = vand.u32 %v319, 4294901760
      %628 = vmatpush.msra.mxu0 %v627
      %v629 = vand.u32 %v307, 4294901760
      %630 = vmatpush.msra.mxu0 %v629
      %v631 = vand.u32 %v295, 4294901760
      %632 = vmatpush.msra.mxu0 %v631
      %v633 = vand.u32 %v283, 4294901760
      %634 = vmatpush.msra.mxu0 %v633
      %v635 = vand.u32 %v271, 4294901760
      %636 = vmatpush.msra.mxu0 %v635
      %v637 = vand.u32 %v259, 4294901760
      %638 = vmatpush.msra.mxu0 %v637
      %v639 = vand.u32 %v246, 4294901760
      %640 = vmatpush.msra.mxu0 %v639
      %v641 = vand.u32 %v364, 4294901760
      %642 = vmatmul.f32.gmra.mxu0 %v641
      %v643 = vpop.f32.mrf.mxu0
      %v644 = vadd.f32 %v610, %v643
      %v645 = vand.u32 %v367, 4294901760
      %646 = vmatmul.f32.gmra.mxu0 %v645
      %v647 = vpop.f32.mrf.mxu0
      %v648 = vadd.f32 %v614, %v647
      %649 = vdwg.mxu0
      %650 = vmatpush.msra.mxu0 0.0
      %651 = vmatpush.msra.mxu0 0.0
      %652 = vmatpush.msra.mxu0 0.0
      %653 = vmatpush.msra.mxu0 0.0
      %654 = vmatpush.msra.mxu0 0.0
      %655 = vmatpush.msra.mxu0 0.0
      %656 = vmatpush.msra.mxu0 0.0
      %v657 = vand.u32 %v344, 4294901760
      %658 = vmatpush.msra.mxu0 %v657
      %v659 = vand.u32 %v332, 4294901760
      %660 = vmatpush.msra.mxu0 %v659
      %v661 = vand.u32 %v320, 4294901760
      %662 = vmatpush.msra.mxu0 %v661
      %v663 = vand.u32 %v308, 4294901760
      %664 = vmatpush.msra.mxu0 %v663
      %v665 = vand.u32 %v296, 4294901760
      %666 = vmatpush.msra.mxu0 %v665
      %v667 = vand.u32 %v284, 4294901760
      %668 = vmatpush.msra.mxu0 %v667
      %v669 = vand.u32 %v272, 4294901760
      %670 = vmatpush.msra.mxu0 %v669
      %v671 = vand.u32 %v260, 4294901760
      %672 = vmatpush.msra.mxu0 %v671
      %v673 = vand.u32 %v247, 4294901760
      %674 = vmatpush.msra.mxu0 %v673
      %v675 = vand.u32 %v364, 4294901760
      %v676 = vsub.f32 %v364, %v675
      %v677 = vand.u32 %v676, 4294901760
      %v678 = vsub.f32 %v676, %v677
      %v679 = vand.u32 %v678, 4294901760
      %680 = vmatmul.f32.gmra.mxu0 %v679
      %v681 = vpop.f32.mrf.mxu0
      %v682 = vadd.f32 %v355, %v681
      %v683 = vand.u32 %v367, 4294901760
      %v684 = vsub.f32 %v367, %v683
      %v685 = vand.u32 %v684, 4294901760
      %v686 = vsub.f32 %v684, %v685
      %v687 = vand.u32 %v686, 4294901760
      %688 = vmatmul.f32.gmra.mxu0 %v687
      %v689 = vpop.f32.mrf.mxu0
      %v690 = vadd.f32 %v360, %v689
      %691 = vdwg.mxu0
      %692 = vmatpush.msra.mxu0 0.0
      %693 = vmatpush.msra.mxu0 0.0
      %694 = vmatpush.msra.mxu0 0.0
      %695 = vmatpush.msra.mxu0 0.0
      %696 = vmatpush.msra.mxu0 0.0
      %697 = vmatpush.msra.mxu0 0.0
      %698 = vmatpush.msra.mxu0 0.0
      %v699 = vand.u32 %v344, 4294901760
      %v700 = vsub.f32 %v344, %v699
      %v701 = vand.u32 %v700, 4294901760
      %v702 = vsub.f32 %v700, %v701
      %v703 = vand.u32 %v702, 4294901760
      %704 = vmatpush.msra.mxu0 %v703
      %v705 = vand.u32 %v332, 4294901760
      %v706 = vsub.f32 %v332, %v705
      %v707 = vand.u32 %v706, 4294901760
      %v708 = vsub.f32 %v706, %v707
      %v709 = vand.u32 %v708, 4294901760
      %710 = vmatpush.msra.mxu0 %v709
      %v711 = vand.u32 %v320, 4294901760
      %v712 = vsub.f32 %v320, %v711
      %v713 = vand.u32 %v712, 4294901760
      %v714 = vsub.f32 %v712, %v713
      %v715 = vand.u32 %v714, 4294901760
      %716 = vmatpush.msra.mxu0 %v715
      %v717 = vand.u32 %v308, 4294901760
      %v718 = vsub.f32 %v308, %v717
      %v719 = vand.u32 %v718, 4294901760
      %v720 = vsub.f32 %v718, %v719
      %v721 = vand.u32 %v720, 4294901760
      %722 = vmatpush.msra.mxu0 %v721
      %v723 = vand.u32 %v296, 4294901760
      %v724 = vsub.f32 %v296, %v723
      %v725 = vand.u32 %v724, 4294901760
      %v726 = vsub.f32 %v724, %v725
      %v727 = vand.u32 %v726, 4294901760
      %728 = vmatpush.msra.mxu0 %v727
      %v729 = vand.u32 %v284, 4294901760
      %v730 = vsub.f32 %v284, %v729
      %v731 = vand.u32 %v730, 4294901760
      %v732 = vsub.f32 %v730, %v731
      %v733 = vand.u32 %v732, 4294901760
      %734 = vmatpush.msra.mxu0 %v733
      %v735 = vand.u32 %v272, 4294901760
      %v736 = vsub.f32 %v272, %v735
      %v737 = vand.u32 %v736, 4294901760
      %v738 = vsub.f32 %v736, %v737
      %v739 = vand.u32 %v738, 4294901760
      %740 = vmatpush.msra.mxu0 %v739
      %v741 = vand.u32 %v260, 4294901760
      %v742 = vsub.f32 %v260, %v741
      %v743 = vand.u32 %v742, 4294901760
      %v744 = vsub.f32 %v742, %v743
      %v745 = vand.u32 %v744, 4294901760
      %746 = vmatpush.msra.mxu0 %v745
      %v747 = vand.u32 %v247, 4294901760
      %v748 = vsub.f32 %v247, %v747
      %v749 = vand.u32 %v748, 4294901760
      %v750 = vsub.f32 %v748, %v749
      %v751 = vand.u32 %v750, 4294901760
      %752 = vmatpush.msra.mxu0 %v751
      %v753 = vand.u32 %v364, 4294901760
      %754 = vmatmul.f32.gmra.mxu0 %v753
      %v755 = vpop.f32.mrf.mxu0
      %v756 = vadd.f32 %v682, %v755
      %v757 = vand.u32 %v367, 4294901760
      %758 = vmatmul.f32.gmra.mxu0 %v757
      %v759 = vpop.f32.mrf.mxu0
      %v760 = vadd.f32 %v690, %v759
      %761 = vdwg.mxu0
      %762 = vmatpush.msra.mxu0 0.0
      %763 = vmatpush.msra.mxu0 0.0
      %764 = vmatpush.msra.mxu0 0.0
      %765 = vmatpush.msra.mxu0 0.0
      %766 = vmatpush.msra.mxu0 0.0
      %767 = vmatpush.msra.mxu0 0.0
      %768 = vmatpush.msra.mxu0 0.0
      %v769 = vand.u32 %v344, 4294901760
      %v770 = vsub.f32 %v344, %v769
      %771 = vmatpush.msra.mxu0 %v770
      %v772 = vand.u32 %v332, 4294901760
      %v773 = vsub.f32 %v332, %v772
      %774 = vmatpush.msra.mxu0 %v773
      %v775 = vand.u32 %v320, 4294901760
      %v776 = vsub.f32 %v320, %v775
      %777 = vmatpush.msra.mxu0 %v776
      %v778 = vand.u32 %v308, 4294901760
      %v779 = vsub.f32 %v308, %v778
      %780 = vmatpush.msra.mxu0 %v779
      %v781 = vand.u32 %v296, 4294901760
      %v782 = vsub.f32 %v296, %v781
      %783 = vmatpush.msra.mxu0 %v782
      %v784 = vand.u32 %v284, 4294901760
      %v785 = vsub.f32 %v284, %v784
      %786 = vmatpush.msra.mxu0 %v785
      %v787 = vand.u32 %v272, 4294901760
      %v788 = vsub.f32 %v272, %v787
      %789 = vmatpush.msra.mxu0 %v788
      %v790 = vand.u32 %v260, 4294901760
      %v791 = vsub.f32 %v260, %v790
      %792 = vmatpush.msra.mxu0 %v791
      %v793 = vand.u32 %v247, 4294901760
      %v794 = vsub.f32 %v247, %v793
      %795 = vmatpush.msra.mxu0 %v794
      %v796 = vand.u32 %v364, 4294901760
      %v797 = vsub.f32 %v364, %v796
      %798 = vmatmul.f32.gmra.mxu0 %v797
      %v799 = vpop.f32.mrf.mxu0
      %v800 = vadd.f32 %v756, %v799
      %v801 = vand.u32 %v367, 4294901760
      %v802 = vsub.f32 %v367, %v801
      %803 = vmatmul.f32.gmra.mxu0 %v802
      %v804 = vpop.f32.mrf.mxu0
      %v805 = vadd.f32 %v760, %v804
      %806 = vdwg.mxu0
      %807 = vmatpush.msra.mxu0 0.0
      %808 = vmatpush.msra.mxu0 0.0
      %809 = vmatpush.msra.mxu0 0.0
      %810 = vmatpush.msra.mxu0 0.0
      %811 = vmatpush.msra.mxu0 0.0
      %812 = vmatpush.msra.mxu0 0.0
      %813 = vmatpush.msra.mxu0 0.0
      %v814 = vand.u32 %v344, 4294901760
      %815 = vmatpush.msra.mxu0 %v814
      %v816 = vand.u32 %v332, 4294901760
      %817 = vmatpush.msra.mxu0 %v816
      %v818 = vand.u32 %v320, 4294901760
      %819 = vmatpush.msra.mxu0 %v818
      %v820 = vand.u32 %v308, 4294901760
      %821 = vmatpush.msra.mxu0 %v820
      %v822 = vand.u32 %v296, 4294901760
      %823 = vmatpush.msra.mxu0 %v822
      %v824 = vand.u32 %v284, 4294901760
      %825 = vmatpush.msra.mxu0 %v824
      %v826 = vand.u32 %v272, 4294901760
      %827 = vmatpush.msra.mxu0 %v826
      %v828 = vand.u32 %v260, 4294901760
      %829 = vmatpush.msra.mxu0 %v828
      %v830 = vand.u32 %v247, 4294901760
      %831 = vmatpush.msra.mxu0 %v830
      %v832 = vand.u32 %v364, 4294901760
      %v833 = vsub.f32 %v364, %v832
      %v834 = vand.u32 %v833, 4294901760
      %835 = vmatmul.f32.gmra.mxu0 %v834
      %v836 = vpop.f32.mrf.mxu0
      %v837 = vadd.f32 %v800, %v836
      %v838 = vand.u32 %v367, 4294901760
      %v839 = vsub.f32 %v367, %v838
      %v840 = vand.u32 %v839, 4294901760
      %841 = vmatmul.f32.gmra.mxu0 %v840
      %v842 = vpop.f32.mrf.mxu0
      %v843 = vadd.f32 %v805, %v842
      %844 = vdwg.mxu0
      %845 = vmatpush.msra.mxu0 0.0
      %846 = vmatpush.msra.mxu0 0.0
      %847 = vmatpush.msra.mxu0 0.0
      %848 = vmatpush.msra.mxu0 0.0
      %849 = vmatpush.msra.mxu0 0.0
      %850 = vmatpush.msra.mxu0 0.0
      %851 = vmatpush.msra.mxu0 0.0
      %v852 = vand.u32 %v344, 4294901760
      %v853 = vsub.f32 %v344, %v852
      %v854 = vand.u32 %v853, 4294901760
      %855 = vmatpush.msra.mxu0 %v854
      %v856 = vand.u32 %v332, 4294901760
      %v857 = vsub.f32 %v332, %v856
      %v858 = vand.u32 %v857, 4294901760
      %859 = vmatpush.msra.mxu0 %v858
      %v860 = vand.u32 %v320, 4294901760
      %v861 = vsub.f32 %v320, %v860
      %v862 = vand.u32 %v861, 4294901760
      %863 = vmatpush.msra.mxu0 %v862
      %v864 = vand.u32 %v308, 4294901760
      %v865 = vsub.f32 %v308, %v864
      %v866 = vand.u32 %v865, 4294901760
      %867 = vmatpush.msra.mxu0 %v866
      %v868 = vand.u32 %v296, 4294901760
      %v869 = vsub.f32 %v296, %v868
      %v870 = vand.u32 %v869, 4294901760
      %871 = vmatpush.msra.mxu0 %v870
      %v872 = vand.u32 %v284, 4294901760
      %v873 = vsub.f32 %v284, %v872
      %v874 = vand.u32 %v873, 4294901760
      %875 = vmatpush.msra.mxu0 %v874
      %v876 = vand.u32 %v272, 4294901760
      %v877 = vsub.f32 %v272, %v876
      %v878 = vand.u32 %v877, 4294901760
      %879 = vmatpush.msra.mxu0 %v878
      %v880 = vand.u32 %v260, 4294901760
      %v881 = vsub.f32 %v260, %v880
      %v882 = vand.u32 %v881, 4294901760
      %883 = vmatpush.msra.mxu0 %v882
      %v884 = vand.u32 %v247, 4294901760
      %v885 = vsub.f32 %v247, %v884
      %v886 = vand.u32 %v885, 4294901760
      %887 = vmatpush.msra.mxu0 %v886
      %v888 = vand.u32 %v364, 4294901760
      %889 = vmatmul.f32.gmra.mxu0 %v888
      %v890 = vpop.f32.mrf.mxu0
      %v891 = vadd.f32 %v837, %v890
      %v892 = vand.u32 %v367, 4294901760
      %893 = vmatmul.f32.gmra.mxu0 %v892
      %v894 = vpop.f32.mrf.mxu0
      %v895 = vadd.f32 %v843, %v894
      %896 = vdwg.mxu0
      %897 = vmatpush.msra.mxu0 0.0
      %898 = vmatpush.msra.mxu0 0.0
      %899 = vmatpush.msra.mxu0 0.0
      %900 = vmatpush.msra.mxu0 0.0
      %901 = vmatpush.msra.mxu0 0.0
      %902 = vmatpush.msra.mxu0 0.0
      %903 = vmatpush.msra.mxu0 0.0
      %v904 = vand.u32 %v344, 4294901760
      %905 = vmatpush.msra.mxu0 %v904
      %v906 = vand.u32 %v332, 4294901760
      %907 = vmatpush.msra.mxu0 %v906
      %v908 = vand.u32 %v320, 4294901760
      %909 = vmatpush.msra.mxu0 %v908
      %v910 = vand.u32 %v308, 4294901760
      %911 = vmatpush.msra.mxu0 %v910
      %v912 = vand.u32 %v296, 4294901760
      %913 = vmatpush.msra.mxu0 %v912
      %v914 = vand.u32 %v284, 4294901760
      %915 = vmatpush.msra.mxu0 %v914
      %v916 = vand.u32 %v272, 4294901760
      %917 = vmatpush.msra.mxu0 %v916
      %v918 = vand.u32 %v260, 4294901760
      %919 = vmatpush.msra.mxu0 %v918
      %v920 = vand.u32 %v247, 4294901760
      %921 = vmatpush.msra.mxu0 %v920
      %v922 = vand.u32 %v364, 4294901760
      %923 = vmatmul.f32.gmra.mxu0 %v922
      %v924 = vpop.f32.mrf.mxu0
      %v925 = vadd.f32 %v891, %v924
      %v926 = vand.u32 %v367, 4294901760
      %927 = vmatmul.f32.gmra.mxu0 %v926
      %v928 = vpop.f32.mrf.mxu0
      %v929 = vadd.f32 %v895, %v928
      %930 = vdwg.mxu0
      %931 = vmatpush.msra.mxu0 0.0
      %932 = vmatpush.msra.mxu0 0.0
      %933 = vmatpush.msra.mxu0 0.0
      %934 = vmatpush.msra.mxu0 0.0
      %935 = vmatpush.msra.mxu0 0.0
      %936 = vmatpush.msra.mxu0 0.0
      %937 = vmatpush.msra.mxu0 0.0
      %v938 = vand.u32 %v341, 4294901760
      %939 = vmatpush.msra.mxu0 %v938
      %v940 = vand.u32 %v329, 4294901760
      %941 = vmatpush.msra.mxu0 %v940
      %v942 = vand.u32 %v317, 4294901760
      %943 = vmatpush.msra.mxu0 %v942
      %v944 = vand.u32 %v305, 4294901760
      %945 = vmatpush.msra.mxu0 %v944
      %v946 = vand.u32 %v293, 4294901760
      %947 = vmatpush.msra.mxu0 %v946
      %v948 = vand.u32 %v281, 4294901760
      %949 = vmatpush.msra.mxu0 %v948
      %v950 = vand.u32 %v269, 4294901760
      %951 = vmatpush.msra.mxu0 %v950
      %v952 = vand.u32 %v257, 4294901760
      %953 = vmatpush.msra.mxu0 %v952
      %v954 = vand.u32 %v248, 4294901760
      %955 = vmatpush.msra.mxu0 %v954
      %v956 = vand.u32 %v364, 4294901760
      %v957 = vsub.f32 %v364, %v956
      %v958 = vand.u32 %v957, 4294901760
      %v959 = vsub.f32 %v957, %v958
      %v960 = vand.u32 %v959, 4294901760
      %961 = vmatmul.f32.gmra.mxu0 %v960
      %v962 = vpop.f32.mrf.mxu0
      %v963 = vadd.f32 %v355, %v962
      %v964 = vand.u32 %v367, 4294901760
      %v965 = vsub.f32 %v367, %v964
      %v966 = vand.u32 %v965, 4294901760
      %v967 = vsub.f32 %v965, %v966
      %v968 = vand.u32 %v967, 4294901760
      %969 = vmatmul.f32.gmra.mxu0 %v968
      %v970 = vpop.f32.mrf.mxu0
      %v971 = vadd.f32 %v360, %v970
      %972 = vdwg.mxu0
      %973 = vmatpush.msra.mxu0 0.0
      %974 = vmatpush.msra.mxu0 0.0
      %975 = vmatpush.msra.mxu0 0.0
      %976 = vmatpush.msra.mxu0 0.0
      %977 = vmatpush.msra.mxu0 0.0
      %978 = vmatpush.msra.mxu0 0.0
      %979 = vmatpush.msra.mxu0 0.0
      %v980 = vand.u32 %v341, 4294901760
      %v981 = vsub.f32 %v341, %v980
      %v982 = vand.u32 %v981, 4294901760
      %v983 = vsub.f32 %v981, %v982
      %v984 = vand.u32 %v983, 4294901760
      %985 = vmatpush.msra.mxu0 %v984
      %v986 = vand.u32 %v329, 4294901760
      %v987 = vsub.f32 %v329, %v986
      %v988 = vand.u32 %v987, 4294901760
      %v989 = vsub.f32 %v987, %v988
      %v990 = vand.u32 %v989, 4294901760
      %991 = vmatpush.msra.mxu0 %v990
      %v992 = vand.u32 %v317, 4294901760
      %v993 = vsub.f32 %v317, %v992
      %v994 = vand.u32 %v993, 4294901760
      %v995 = vsub.f32 %v993, %v994
      %v996 = vand.u32 %v995, 4294901760
      %997 = vmatpush.msra.mxu0 %v996
      %v998 = vand.u32 %v305, 4294901760
      %v999 = vsub.f32 %v305, %v998
      %v1000 = vand.u32 %v999, 4294901760
      %v1001 = vsub.f32 %v999, %v1000
      %v1002 = vand.u32 %v1001, 4294901760
      %1003 = vmatpush.msra.mxu0 %v1002
      %v1004 = vand.u32 %v293, 4294901760
      %v1005 = vsub.f32 %v293, %v1004
      %v1006 = vand.u32 %v1005, 4294901760
      %v1007 = vsub.f32 %v1005, %v1006
      %v1008 = vand.u32 %v1007, 4294901760
      %1009 = vmatpush.msra.mxu0 %v1008
      %v1010 = vand.u32 %v281, 4294901760
      %v1011 = vsub.f32 %v281, %v1010
      %v1012 = vand.u32 %v1011, 4294901760
      %v1013 = vsub.f32 %v1011, %v1012
      %v1014 = vand.u32 %v1013, 4294901760
      %1015 = vmatpush.msra.mxu0 %v1014
      %v1016 = vand.u32 %v269, 4294901760
      %v1017 = vsub.f32 %v269, %v1016
      %v1018 = vand.u32 %v1017, 4294901760
      %v1019 = vsub.f32 %v1017, %v1018
      %v1020 = vand.u32 %v1019, 4294901760
      %1021 = vmatpush.msra.mxu0 %v1020
      %v1022 = vand.u32 %v257, 4294901760
      %v1023 = vsub.f32 %v257, %v1022
      %v1024 = vand.u32 %v1023, 4294901760
      %v1025 = vsub.f32 %v1023, %v1024
      %v1026 = vand.u32 %v1025, 4294901760
      %1027 = vmatpush.msra.mxu0 %v1026
      %v1028 = vand.u32 %v248, 4294901760
      %v1029 = vsub.f32 %v248, %v1028
      %v1030 = vand.u32 %v1029, 4294901760
      %v1031 = vsub.f32 %v1029, %v1030
      %v1032 = vand.u32 %v1031, 4294901760
      %1033 = vmatpush.msra.mxu0 %v1032
      %v1034 = vand.u32 %v364, 4294901760
      %1035 = vmatmul.f32.gmra.mxu0 %v1034
      %v1036 = vpop.f32.mrf.mxu0
      %v1037 = vadd.f32 %v963, %v1036
      %v1038 = vand.u32 %v367, 4294901760
      %1039 = vmatmul.f32.gmra.mxu0 %v1038
      %v1040 = vpop.f32.mrf.mxu0
      %v1041 = vadd.f32 %v971, %v1040
      %1042 = vdwg.mxu0
      %1043 = vmatpush.msra.mxu0 0.0
      %1044 = vmatpush.msra.mxu0 0.0
      %1045 = vmatpush.msra.mxu0 0.0
      %1046 = vmatpush.msra.mxu0 0.0
      %1047 = vmatpush.msra.mxu0 0.0
      %1048 = vmatpush.msra.mxu0 0.0
      %1049 = vmatpush.msra.mxu0 0.0
      %v1050 = vand.u32 %v341, 4294901760
      %v1051 = vsub.f32 %v341, %v1050
      %1052 = vmatpush.msra.mxu0 %v1051
      %v1053 = vand.u32 %v329, 4294901760
      %v1054 = vsub.f32 %v329, %v1053
      %1055 = vmatpush.msra.mxu0 %v1054
      %v1056 = vand.u32 %v317, 4294901760
      %v1057 = vsub.f32 %v317, %v1056
      %1058 = vmatpush.msra.mxu0 %v1057
      %v1059 = vand.u32 %v305, 4294901760
      %v1060 = vsub.f32 %v305, %v1059
      %1061 = vmatpush.msra.mxu0 %v1060
      %v1062 = vand.u32 %v293, 4294901760
      %v1063 = vsub.f32 %v293, %v1062
      %1064 = vmatpush.msra.mxu0 %v1063
      %v1065 = vand.u32 %v281, 4294901760
      %v1066 = vsub.f32 %v281, %v1065
      %1067 = vmatpush.msra.mxu0 %v1066
      %v1068 = vand.u32 %v269, 4294901760
      %v1069 = vsub.f32 %v269, %v1068
      %1070 = vmatpush.msra.mxu0 %v1069
      %v1071 = vand.u32 %v257, 4294901760
      %v1072 = vsub.f32 %v257, %v1071
      %1073 = vmatpush.msra.mxu0 %v1072
      %v1074 = vand.u32 %v248, 4294901760
      %v1075 = vsub.f32 %v248, %v1074
      %1076 = vmatpush.msra.mxu0 %v1075
      %v1077 = vand.u32 %v364, 4294901760
      %v1078 = vsub.f32 %v364, %v1077
      %1079 = vmatmul.f32.gmra.mxu0 %v1078
      %v1080 = vpop.f32.mrf.mxu0
      %v1081 = vadd.f32 %v1037, %v1080
      %v1082 = vand.u32 %v367, 4294901760
      %v1083 = vsub.f32 %v367, %v1082
      %1084 = vmatmul.f32.gmra.mxu0 %v1083
      %v1085 = vpop.f32.mrf.mxu0
      %v1086 = vadd.f32 %v1041, %v1085
      %1087 = vdwg.mxu0
      %1088 = vmatpush.msra.mxu0 0.0
      %1089 = vmatpush.msra.mxu0 0.0
      %1090 = vmatpush.msra.mxu0 0.0
      %1091 = vmatpush.msra.mxu0 0.0
      %1092 = vmatpush.msra.mxu0 0.0
      %1093 = vmatpush.msra.mxu0 0.0
      %1094 = vmatpush.msra.mxu0 0.0
      %v1095 = vand.u32 %v341, 4294901760
      %1096 = vmatpush.msra.mxu0 %v1095
      %v1097 = vand.u32 %v329, 4294901760
      %1098 = vmatpush.msra.mxu0 %v1097
      %v1099 = vand.u32 %v317, 4294901760
      %1100 = vmatpush.msra.mxu0 %v1099
      %v1101 = vand.u32 %v305, 4294901760
      %1102 = vmatpush.msra.mxu0 %v1101
      %v1103 = vand.u32 %v293, 4294901760
      %1104 = vmatpush.msra.mxu0 %v1103
      %v1105 = vand.u32 %v281, 4294901760
      %1106 = vmatpush.msra.mxu0 %v1105
      %v1107 = vand.u32 %v269, 4294901760
      %1108 = vmatpush.msra.mxu0 %v1107
      %v1109 = vand.u32 %v257, 4294901760
      %1110 = vmatpush.msra.mxu0 %v1109
      %v1111 = vand.u32 %v248, 4294901760
      %1112 = vmatpush.msra.mxu0 %v1111
      %v1113 = vand.u32 %v364, 4294901760
      %v1114 = vsub.f32 %v364, %v1113
      %v1115 = vand.u32 %v1114, 4294901760
      %1116 = vmatmul.f32.gmra.mxu0 %v1115
      %v1117 = vpop.f32.mrf.mxu0
      %v1118 = vadd.f32 %v1081, %v1117
      %v1119 = vand.u32 %v367, 4294901760
      %v1120 = vsub.f32 %v367, %v1119
      %v1121 = vand.u32 %v1120, 4294901760
      %1122 = vmatmul.f32.gmra.mxu0 %v1121
      %v1123 = vpop.f32.mrf.mxu0
      %v1124 = vadd.f32 %v1086, %v1123
      %1125 = vdwg.mxu0
      %1126 = vmatpush.msra.mxu0 0.0
      %1127 = vmatpush.msra.mxu0 0.0
      %1128 = vmatpush.msra.mxu0 0.0
      %1129 = vmatpush.msra.mxu0 0.0
      %1130 = vmatpush.msra.mxu0 0.0
      %1131 = vmatpush.msra.mxu0 0.0
      %1132 = vmatpush.msra.mxu0 0.0
      %v1133 = vand.u32 %v341, 4294901760
      %v1134 = vsub.f32 %v341, %v1133
      %v1135 = vand.u32 %v1134, 4294901760
      %1136 = vmatpush.msra.mxu0 %v1135
      %v1137 = vand.u32 %v329, 4294901760
      %v1138 = vsub.f32 %v329, %v1137
      %v1139 = vand.u32 %v1138, 4294901760
      %1140 = vmatpush.msra.mxu0 %v1139
      %v1141 = vand.u32 %v317, 4294901760
      %v1142 = vsub.f32 %v317, %v1141
      %v1143 = vand.u32 %v1142, 4294901760
      %1144 = vmatpush.msra.mxu0 %v1143
      %v1145 = vand.u32 %v305, 4294901760
      %v1146 = vsub.f32 %v305, %v1145
      %v1147 = vand.u32 %v1146, 4294901760
      %1148 = vmatpush.msra.mxu0 %v1147
      %v1149 = vand.u32 %v293, 4294901760
      %v1150 = vsub.f32 %v293, %v1149
      %v1151 = vand.u32 %v1150, 4294901760
      %1152 = vmatpush.msra.mxu0 %v1151
      %v1153 = vand.u32 %v281, 4294901760
      %v1154 = vsub.f32 %v281, %v1153
      %v1155 = vand.u32 %v1154, 4294901760
      %1156 = vmatpush.msra.mxu0 %v1155
      %v1157 = vand.u32 %v269, 4294901760
      %v1158 = vsub.f32 %v269, %v1157
      %v1159 = vand.u32 %v1158, 4294901760
      %1160 = vmatpush.msra.mxu0 %v1159
      %v1161 = vand.u32 %v257, 4294901760
      %v1162 = vsub.f32 %v257, %v1161
      %v1163 = vand.u32 %v1162, 4294901760
      %1164 = vmatpush.msra.mxu0 %v1163
      %v1165 = vand.u32 %v248, 4294901760
      %v1166 = vsub.f32 %v248, %v1165
      %v1167 = vand.u32 %v1166, 4294901760
      %1168 = vmatpush.msra.mxu0 %v1167
      %v1169 = vand.u32 %v364, 4294901760
      %1170 = vmatmul.f32.gmra.mxu0 %v1169
      %v1171 = vpop.f32.mrf.mxu0
      %v1172 = vadd.f32 %v1118, %v1171
      %v1173 = vand.u32 %v367, 4294901760
      %1174 = vmatmul.f32.gmra.mxu0 %v1173
      %v1175 = vpop.f32.mrf.mxu0
      %v1176 = vadd.f32 %v1124, %v1175
      %1177 = vdwg.mxu0
      %1178 = vmatpush.msra.mxu0 0.0
      %1179 = vmatpush.msra.mxu0 0.0
      %1180 = vmatpush.msra.mxu0 0.0
      %1181 = vmatpush.msra.mxu0 0.0
      %1182 = vmatpush.msra.mxu0 0.0
      %1183 = vmatpush.msra.mxu0 0.0
      %1184 = vmatpush.msra.mxu0 0.0
      %v1185 = vand.u32 %v341, 4294901760
      %1186 = vmatpush.msra.mxu0 %v1185
      %v1187 = vand.u32 %v329, 4294901760
      %1188 = vmatpush.msra.mxu0 %v1187
      %v1189 = vand.u32 %v317, 4294901760
      %1190 = vmatpush.msra.mxu0 %v1189
      %v1191 = vand.u32 %v305, 4294901760
      %1192 = vmatpush.msra.mxu0 %v1191
      %v1193 = vand.u32 %v293, 4294901760
      %1194 = vmatpush.msra.mxu0 %v1193
      %v1195 = vand.u32 %v281, 4294901760
      %1196 = vmatpush.msra.mxu0 %v1195
      %v1197 = vand.u32 %v269, 4294901760
      %1198 = vmatpush.msra.mxu0 %v1197
      %v1199 = vand.u32 %v257, 4294901760
      %1200 = vmatpush.msra.mxu0 %v1199
      %v1201 = vand.u32 %v248, 4294901760
      %1202 = vmatpush.msra.mxu0 %v1201
      %v1203 = vand.u32 %v364, 4294901760
      %1204 = vmatmul.f32.gmra.mxu0 %v1203
      %v1205 = vpop.f32.mrf.mxu0
      %v1206 = vadd.f32 %v1172, %v1205
      %v1207 = vand.u32 %v367, 4294901760
      %1208 = vmatmul.f32.gmra.mxu0 %v1207
      %v1209 = vpop.f32.mrf.mxu0
      %v1210 = vadd.f32 %v1176, %v1209
      %1211 = vdwg.mxu0
      %1212 = vst [vmem:[%s217] sm:$0xff] %v644
      %1213 = vst [vmem:[%s217 + $0x8] sm:$0xff] %v925
      %vm1214 = vcmask 244736
      %1215 = vst.msk [vmem:[%s217 + $0x10] sm:$0xff] %vm1214, %v1206
      %1216 = vst [vmem:[%s217 + $0x18] sm:$0xff] %v648
      %1217 = vst [vmem:[%s217 + $0x20] sm:$0xff] %v929
      %1218 = vst.msk [vmem:[%s217 + $0x28] sm:$0xff] %vm1214, %v1210
      %p1219 = scmp.lt.s32.totalorder %s15, 1
      %s1220 = scalar_select %p1219, %s15, 1
      %s1221 = smul.addr %s1220, 6
      %s1222 = smul.addr %s1221, 8
      %s1223 = scalar_lea.vmem %s4, %s1222
      // Predicated region
      $region37: #{complex_conv2d.1} parent=35 // pred_check
        %p1224 = pneg %p127
      $region38: #{complex_conv2d.1} parent=35 // pred_check_branch
        %1226 = sbr.rel (%p1224) target = $region40
      $region39: #{complex_conv2d.1} parent=35 // pred_region
        _
      $region40: #{complex_conv2d.1} parent=35 // pred_fallthru
        _
    $region36: #{complex_conv2d.1} parent=5 // pred_fallthru
      _
    %p1227 = scmp.le.s32.totalorder 2, %s10
    // Predicated region
    $region41: #{complex_conv2d.1} parent=5 // pred_check
      %p1228 = pneg %p1227
    $region42: #{complex_conv2d.1} parent=5 // pred_check_branch
      %1230 = sbr.rel (%p1228) target = $region44
    $region43: #{complex_conv2d.1} parent=5 // pred_region
      %s1231 = ssub.s32 %s10, 2
      // Predicated region
      $region45: #{complex_conv2d.1} parent=43 // pred_check
        %p1232 = pneg %p133
      $region46: #{complex_conv2d.1} parent=43 // pred_check_branch
        %1234 = sbr.rel (%p1232) target = $region48
      $region47: #{complex_conv2d.1} parent=43 // pred_region
        %p1235 = scmp.lt.s32.totalorder %s16, 1
        %s1236 = scalar_select %p1235, %s16, 1
        %s1237 = smul.addr %s1236, 6
        %s1238 = smul.addr %s1237, 8
        %s1239 = scalar_lea.vmem %s4, %s1238
      $region48: #{complex_conv2d.1} parent=43 // pred_fallthru
        _
    $region44: #{complex_conv2d.1} parent=5 // pred_fallthru
      _
  $region6: #{complex_conv2d.1} parent=0 // loop_footer
    %s14 = sadd.s32 1, %s10
  $region7: #{complex_conv2d.1} parent=0 // loop_footer_branch
    %9 = sbr.rel target = $region3
  $region8: #{complex_conv2d.1} parent=0 // loop_exit
    _

</llo_original>
